<compile_context>
chip_gen: v7x
topology: tpu7x:2x2x1
jax: 0.10.0
libtpu: 0.0.40
codegen_flags: <defaults>
</compile_context>

<pallas_src>
import functools
import math

import jax
import jax.numpy as jnp
from jax.experimental import pallas as pl
from jax.experimental.pallas import tpu as pltpu

LRELU_SLOPE = 0.02
PRELU_INIT = 0.25   # PyTorch nn.PReLU() default init of its (learnable) slope
LN_EPS = 1e-5


def _apply_activation(y, activation):
    """Static (trace-time) activation selection; matches act_layer()."""
    if activation is None:
        return y
    if activation == "relu":
        return jnp.maximum(y, 0.0)
    if activation == "lrelu":
        return jnp.where(y > 0, y, LRELU_SLOPE * y)
    if activation == "elu":
        return jnp.where(y > 0, y, jnp.exp(y) - 1.0)
    if activation == "tanh":
        return jnp.tanh(y)
    if activation == "prelu":
        # TODO(synk): PReLU slope is a learnable parameter; we use its init value.
        return jnp.where(y > 0, y, PRELU_INIT * y)
    raise ValueError("%s not recognized." % activation)


def _epilogue(y, p_ref, *, norm, activation, real_n):
    """bias add + optional fused LayerNorm + optional activation (all f32)."""
    bias = p_ref[0:1, :]                         # [1, N_pad] static slice
    y = y + bias
    if norm == "layer":
        gamma = p_ref[1:2, :]
        beta = p_ref[2:3, :]
        n_pad = y.shape[-1]
        if n_pad != real_n:
            # Masked statistics over the real columns only (padded columns are
            # zero in the matmul/bias but must not contribute to mean / var).
            col = jax.lax.broadcasted_iota(jnp.int32, y.shape, dimension=1)
            mask = col < real_n
            inv_n = 1.0 / float(real_n)
            mean = jnp.sum(jnp.where(mask, y, 0.0), axis=-1, keepdims=True) * inv_n
            centered = jnp.where(mask, y - mean, 0.0)
            var = jnp.sum(centered * centered, axis=-1, keepdims=True) * inv_n
        else:
            mean = jnp.mean(y, axis=-1, keepdims=True)
            centered = y - mean
            var = jnp.mean(centered * centered, axis=-1, keepdims=True)
        y = centered * jax.lax.rsqrt(var + LN_EPS)
        y = y * gamma + beta
    return _apply_activation(y, activation)


def _dense_block_kernel_multi_k(x_ref, wt_ref, p_ref, o_ref, acc_ref,
                                *, norm, activation, real_n):
    """Grid = (M tiles, K tiles); K is the reduction axis (last, arbitrary)."""
    k = pl.program_id(1)

    @pl.when(k == 0)
    def _():
        acc_ref[...] = jnp.zeros_like(acc_ref)

    acc_ref[...] += jnp.dot(x_ref[...], wt_ref[...],
                            preferred_element_type=jnp.float32)

    @pl.when(k == pl.num_programs(1) - 1)
    def _():
        y = _epilogue(acc_ref[...], p_ref,
                      norm=norm, activation=activation, real_n=real_n)
        o_ref[...] = y.astype(o_ref.dtype)


def _dense_block_kernel_single_k(x_ref, wt_ref, p_ref, o_ref,
                                 *, norm, activation, real_n):
    """Grid = (M tiles,); whole K fits one tile -> no scratch accumulator."""
    y = jnp.dot(x_ref[...], wt_ref[...], preferred_element_type=jnp.float32)
    y = _epilogue(y, p_ref, norm=norm, activation=activation, real_n=real_n)
    o_ref[...] = y.astype(o_ref.dtype)


def _round_up(a, b):
    return (a + b - 1) // b * b


def dense_block_forward(x, weight, bias, *, norm=None, activation=None,
                        ln_gamma=None, ln_beta=None):
    """DenseBlock.forward.

    x:      [M, in_features]             float32 / bfloat16
    weight: [out_features, in_features]  (PyTorch nn.Linear layout)
    bias:   [out_features]
    norm:   None or 'layer' (fused in-kernel).
    # TODO(synk): norm='batch'/'instance' need cross-batch statistics (second
    # reduction over the M axis) and are not fused here.
    """
    if norm not in (None, "layer"):
        raise NotImplementedError("only norm in (None, 'layer') is fused in-kernel")

    M, K = x.shape
    N, K2 = weight.shape
    assert K == K2 and bias.shape == (N,)

    # --- tiling -------------------------------------------------------------
    # Tile M for pipelining / megacore; tile K (reduction, last grid axis)
    # only when large. Full (128-padded) N per tile so bias + fused LayerNorm
    # need no cross-tile reduction and stores are unmasked lane-dense vst.
    TM = _round_up(M, 8) if M <= 512 else 256
    M_pad = _round_up(M, TM)
    TK = _round_up(K, 128) if K <= 512 else 512
    K_pad = _round_up(K, TK)
    N_pad = _round_up(N, 128)

    if (M_pad, K_pad) != (M, K):
        x = jnp.pad(x, ((0, M_pad - M), (0, K_pad - K)))

    wt = weight.T.astype(jnp.float32)                       # [K, N]
    if (K_pad, N_pad) != (K, N):
        wt = jnp.pad(wt, ((0, K_pad - K), (0, N_pad - N)))

    # Pack bias / LN gamma / LN beta into one (3, N_pad) parameter slab.
    gamma = (jnp.ones((N,), jnp.float32) if ln_gamma is None
             else ln_gamma.astype(jnp.float32))
    beta = (jnp.zeros((N,), jnp.float32) if ln_beta is None
            else ln_beta.astype(jnp.float32))
    params = jnp.stack([bias.astype(jnp.float32), gamma, beta], axis=0)  # [3, N]
    if N_pad != N:
        params = jnp.pad(params, ((0, 0), (0, N_pad - N)))

    num_m = M_pad // TM
    num_k = K_pad // TK

    if num_k == 1:
        kernel = functools.partial(_dense_block_kernel_single_k,
                                   norm=norm, activation=activation, real_n=N)
        grid = (num_m,)
        in_specs = [
            pl.BlockSpec((TM, TK), lambda i: (i, 0)),        # x tile
            pl.BlockSpec((TK, N_pad), lambda i: (0, 0)),     # W.T (resident)
            pl.BlockSpec((3, N_pad), lambda i: (0, 0)),      # bias/gamma/beta
        ]
        out_specs = pl.BlockSpec((TM, N_pad), lambda i: (i, 0))
        scratch_shapes = []
        dim_sem = ("parallel",)
    else:
        kernel = functools.partial(_dense_block_kernel_multi_k,
                                   norm=norm, activation=activation, real_n=N)
        grid = (num_m, num_k)
        in_specs = [
            pl.BlockSpec((TM, TK), lambda i, k: (i, k)),     # x tile
            pl.BlockSpec((TK, N_pad), lambda i, k: (k, 0)),  # W.T tile
            pl.BlockSpec((3, N_pad), lambda i, k: (0, 0)),   # bias/gamma/beta
        ]
        out_specs = pl.BlockSpec((TM, N_pad), lambda i, k: (i, 0))
        scratch_shapes = [pltpu.VMEM((TM, N_pad), jnp.float32)]
        dim_sem = ("parallel", "arbitrary")

    out = pl.pallas_call(
        kernel,
        out_shape=jax.ShapeDtypeStruct((M_pad, N_pad), x.dtype),
        grid_spec=pltpu.PrefetchScalarGridSpec(
            num_scalar_prefetch=0,
            grid=grid,
            in_specs=in_specs,
            out_specs=out_specs,
            scratch_shapes=scratch_shapes,
        ),
        compiler_params=pltpu.CompilerParams(
            dimension_semantics=dim_sem,
        ),
    )(x, wt, params)

    return out[:M, :N]


def dense_block_reference(x, weight, bias, *, norm=None, activation=None,
                          ln_gamma=None, ln_beta=None):
    """Pure-JAX reference with identical semantics."""
    y = jnp.dot(x, weight.T) + bias
    if norm == "layer":
        mean = jnp.mean(y, axis=-1, keepdims=True)
        var = jnp.mean(jnp.square(y - mean), axis=-1, keepdims=True)
        y = (y - mean) / jnp.sqrt(var + LN_EPS)
        g = jnp.ones(y.shape[-1]) if ln_gamma is None else ln_gamma
        b = jnp.zeros(y.shape[-1]) if ln_beta is None else ln_beta
        y = y * g + b
    return _apply_activation(y, activation)


if __name__ == "__main__":
    key = jax.random.PRNGKey(0)
    k1, k2, k3, k4, k5, k6, k7 = jax.random.split(key, 7)

    # Small deterministic shapes: batch=32, in_features=64, out_features=128.
    batch, in_features, out_features = 32, 64, 128
    x = jax.random.normal(k1, (batch, in_features), dtype=jnp.float32)
    # Deterministic parameter setup (the PyTorch xavier/kaiming init scheme is
    # __init__ glue; forward-pass semantics do not depend on it).
    w = jax.random.normal(k2, (out_features, in_features), dtype=jnp.float32) \
        * (1.0 / math.sqrt(in_features))
    b = 0.1 * jax.random.normal(k3, (out_features,), dtype=jnp.float32)
    gamma = 1.0 + 0.1 * jax.random.normal(k4, (out_features,), dtype=jnp.float32)
    beta = 0.05 * jax.random.normal(k5, (out_features,), dtype=jnp.float32)

    # Config 1: DenseBlock(in, out) -> plain linear.
    out1 = jax.block_until_ready(dense_block_forward(x, w, b))
    ref1 = dense_block_reference(x, w, b)
    assert out1.shape == (batch, out_features)
    assert jnp.allclose(out1, ref1, atol=2e-2, rtol=2e-2), "linear mismatch"

    # Config 2: DenseBlock(in, out, norm='layer', activation='relu').
    out2 = jax.block_until_ready(
        dense_block_forward(x, w, b, norm="layer", activation="relu",
                            ln_gamma=gamma, ln_beta=beta))
    ref2 = dense_block_reference(x, w, b, norm="layer", activation="relu",
                                 ln_gamma=gamma, ln_beta=beta)
    assert jnp.allclose(out2, ref2, atol=2e-2, rtol=2e-2), "layer+relu mismatch"

    # Config 3: DenseBlock(in, out, activation='lrelu').
    out3 = jax.block_until_ready(
        dense_block_forward(x, w, b, activation="lrelu"))
    ref3 = dense_block_reference(x, w, b, activation="lrelu")
    assert jnp.allclose(out3, ref3, atol=2e-2, rtol=2e-2), "lrelu mismatch"

    # Config 4: non-128-multiple out_features exercises masked LayerNorm path.
    out_features2 = 96
    w2 = jax.random.normal(k6, (out_features2, in_features), dtype=jnp.float32) \
        * (1.0 / math.sqrt(in_features))
    b2 = 0.1 * jax.random.normal(k7, (out_features2,), dtype=jnp.float32)
    g2 = jnp.ones((out_features2,), jnp.float32)
    be2 = jnp.zeros((out_features2,), jnp.float32)
    out4 = jax.block_until_ready(
        dense_block_forward(x, w2, b2, norm="layer", activation="elu",
                            ln_gamma=g2, ln_beta=be2))
    ref4 = dense_block_reference(x, w2, b2, norm="layer", activation="elu",
                                 ln_gamma=g2, ln_beta=be2)
    assert out4.shape == (batch, out_features2)
    assert jnp.allclose(out4, ref4, atol=2e-2, rtol=2e-2), "masked layer+elu mismatch"

    # Config 5: DenseBlock(in, out, activation='tanh').
    out5 = jax.block_until_ready(dense_block_forward(x, w, b, activation="tanh"))
    ref5 = dense_block_reference(x, w, b, activation="tanh")
    assert jnp.allclose(out5, ref5, atol=2e-2, rtol=2e-2), "tanh mismatch"

    print("KERNEL_OK")
</pallas_src>

<mosaic_0001>
module attributes {stable_mosaic.version = 11 : i64} {
  func.func @_dense_block_kernel_single_k(%arg0: i32, %arg1: memref<32x128xf32, #tpu.memory_space<vmem>>, %arg2: memref<128x128xf32, #tpu.memory_space<vmem>>, %arg3: memref<3x128xf32, #tpu.memory_space<vmem>>, %arg4: memref<32x128xf32, #tpu.memory_space<vmem>>) attributes {dimension_semantics = [#tpu.dimension_semantics<parallel>], iteration_bounds = array<i64: 1>, scalar_prefetch = 0 : i64, scratch_operands = 0 : i64, tpu.core_type = #tpu.core_type<tc>, window_params = [{transform_indices = @transform_0, window_bounds = array<i64: 32, 128>}, {pipeline_mode = #tpu.pipeline_mode<synchronous>, transform_indices = @transform_1, window_bounds = array<i64: 128, 128>}, {pipeline_mode = #tpu.pipeline_mode<synchronous>, transform_indices = @transform_2, window_bounds = array<i64: 3, 128>}, {transform_indices = @transform_3, window_bounds = array<i64: 32, 128>}]} {
    %c0 = arith.constant 0 : index
    %c0_0 = arith.constant 0 : index
    %0 = vector.load %arg1[%c0, %c0_0] : memref<32x128xf32, #tpu.memory_space<vmem>>, vector<32x128xf32>
    %c0_1 = arith.constant 0 : index
    %c0_2 = arith.constant 0 : index
    %1 = vector.load %arg2[%c0_1, %c0_2] : memref<128x128xf32, #tpu.memory_space<vmem>>, vector<128x128xf32>
    %cst = arith.constant dense<0.000000e+00> : vector<32x128xf32>
    %2 = tpu.matmul %0, %1, %cst {dimension_numbers = #tpu.dot_dimension_numbers<[1], [0], [0], [1], [0, 0, 1, 1], [], []>} : vector<32x128xf32>, vector<128x128xf32>, vector<32x128xf32> -> vector<32x128xf32>
    %c0_3 = arith.constant 0 : index
    %c0_4 = arith.constant 0 : index
    %3 = vector.load %arg3[%c0_3, %c0_4] : memref<3x128xf32, #tpu.memory_space<vmem>>, vector<1x128xf32>
    %4 = vector.broadcast %3 : vector<1x128xf32> to vector<32x128xf32>
    %5 = arith.addf %2, %4 : vector<32x128xf32>
    %c0_5 = arith.constant 0 : index
    %c0_6 = arith.constant 0 : index
    %6 = vector.load %arg4[%c0_5, %c0_6] : memref<32x128xf32, #tpu.memory_space<vmem>>, vector<32x128xf32>
    tpu.vector_store %arg4[%c0_5, %c0_6], %5 {strides = array<i32>} : memref<32x128xf32, #tpu.memory_space<vmem>>, vector<32x128xf32>,
    return
  }
  func.func @transform_0(%arg0: i32) -> (i32, i32) {
    %c0_i32 = arith.constant 0 : i32
    %c0_i32_0 = arith.constant 0 : i32
    return %arg0, %c0_i32 : i32, i32
  }
  func.func @transform_1(%arg0: i32) -> (i32, i32) {
    %c0_i32 = arith.constant 0 : i32
    %c0_i32_0 = arith.constant 0 : i32
    %c0_i32_1 = arith.constant 0 : i32
    return %c0_i32, %c0_i32_0 : i32, i32
  }
  func.func @transform_2(%arg0: i32) -> (i32, i32) {
    %c0_i32 = arith.constant 0 : i32
    %c0_i32_0 = arith.constant 0 : i32
    %c0_i32_1 = arith.constant 0 : i32
    return %c0_i32, %c0_i32_0 : i32, i32
  }
  func.func @transform_3(%arg0: i32) -> (i32, i32) {
    %c0_i32 = arith.constant 0 : i32
    %c0_i32_0 = arith.constant 0 : i32
    return %arg0, %c0_i32 : i32, i32
  }
}

</mosaic_0001>

<llo_original>
// kernel: tpu_custom_call.1
$region0: #{tpu_custom_call.1}
  #allocation0 [shape = 'u32[]', space=smem, size = 0x4, offset = 0x4, fixed_abs, tag = 'smem constant byte address 0x4 - core index']
  #allocation1 [shape = 'u32[144,128]{1,0:T(1,128)}', space=vmem, size = 0x12000, scoped, tag = 'internal scratch']
  %s0 = inlined_call_operand.hbm [shape: f32[32,128], index: 0, kind: input, shape index: {}]
  %s1 = inlined_call_operand.hbm [shape: f32[128,128], index: 1, kind: input, shape index: {}]
  %s2 = inlined_call_operand.vmem [shape: f32[3,128], index: 2, kind: input, shape index: {}]
  %s3 = inlined_call_operand.hbm [shape: f32[32,128], index: 3, kind: output, shape index: {}]
  %s4 = sld [smem:[#allocation0]]
  $region30: #{tpu_custom_call.1} parent=0
    _
  %s6 = ssub.s32 1, %s4
  %s7 = scalar_select 0, %s6, %s4
  $region1: #{tpu_custom_call.1} parent=0
    #allocation2 [shape = 'u8[16384]{0}', space=vmem, size = 0x4000, scoped, tag = 'input window, operand 0, single buffered']
    #allocation3 [shape = 's32[1]{0}', space=sflag, size = 0x4, scoped, tag = 'scoped memory for tpu_custom_call.1']
    #allocation4 [shape = 's32[1]{0}', space=sflag, size = 0x4, scoped, tag = 'scoped memory for tpu_custom_call.1']
    #allocation5 [shape = 'u8[65536]{0}', space=vmem, size = 0x10000, scoped, tag = 'input window, operand 1, single buffered']
    #allocation6 [shape = 's32[1]{0}', space=sflag, size = 0x4, scoped, tag = 'scoped memory for tpu_custom_call.1']
    #allocation7 [shape = 'u8[16384]{0}', space=vmem, size = 0x4000, scoped, tag = 'output window, operand 0, single buffered']
    %8 = vsyncpa [#allocation3], 0
    %9 = vsyncpa [#allocation6], 0
    %10 = vsyncpa [#allocation4], 0
    // Predicated region
    $region2: #{tpu_custom_call.1} parent=1 // pred_check
      _
    $region3: #{tpu_custom_call.1} parent=1 // pred_check_branch
      %12 = sbr.rel (0) target = $region5
    $region4: #{tpu_custom_call.1} parent=1 // pred_region
      %s14 = ssub.s32 512, 512
      %15 = vsyncadd [#allocation3], %s14
      %s16 = sshll.u32 [#allocation2], 4
      %s17 = int_to_ptr.vmem [resolvable:$true] %s16
      %22 = dma.hbm_to_vmem [thread:$0]  %s0, 512, %s17, [#allocation3], 128, 128, 8
    $region5: #{tpu_custom_call.1} parent=1 // pred_fallthru
      _
    // Predicated region
    $region6: #{tpu_custom_call.1} parent=1 // pred_check
      _
    $region7: #{tpu_custom_call.1} parent=1 // pred_check_branch
      %24 = sbr.rel (0) target = $region9
    $region8: #{tpu_custom_call.1} parent=1 // pred_region
      %s26 = ssub.s32 2048, 2048
      %27 = vsyncadd [#allocation6], %s26
      %s28 = sshll.u32 [#allocation5], 4
      %s29 = int_to_ptr.vmem [resolvable:$true] %s28
      %34 = dma.hbm_to_vmem [thread:$0]  %s1, 2048, %s29, [#allocation6], 128, 128, 8
    $region9: #{tpu_custom_call.1} parent=1 // pred_fallthru
      _
    // Predicated region
    $region10: #{tpu_custom_call.1} parent=1 // pred_check
      _
    $region11: #{tpu_custom_call.1} parent=1 // pred_check_branch
      %36 = sbr.rel (0) target = $region13
    $region12: #{tpu_custom_call.1} parent=1 // pred_region
      _
    $region13: #{tpu_custom_call.1} parent=1 // pred_fallthru
      _
    // Predicated region
    $region14: #{tpu_custom_call.1} parent=1 // pred_check
      _
    $region15: #{tpu_custom_call.1} parent=1 // pred_check_branch
      %38 = sbr.rel (0) target = $region17
    $region16: #{tpu_custom_call.1} parent=1 // pred_region
      %39 = dma.done [#allocation3], 512
    $region17: #{tpu_custom_call.1} parent=1 // pred_fallthru
      _
    // Predicated region
    $region18: #{tpu_custom_call.1} parent=1 // pred_check
      _
    $region19: #{tpu_custom_call.1} parent=1 // pred_check_branch
      %41 = sbr.rel (0) target = $region21
    $region20: #{tpu_custom_call.1} parent=1 // pred_region
      %42 = dma.done [#allocation6], 2048
    $region21: #{tpu_custom_call.1} parent=1 // pred_fallthru
      _
    %v43 = vld [vmem:[#allocation2] sm:$0xff]
    %v44 = vld [vmem:[#allocation2 + $0x8] sm:$0xff]
    %v45 = vld [vmem:[#allocation2 + $0x10] sm:$0xff]
    %v46 = vld [vmem:[#allocation2 + $0x18] sm:$0xff]
    %v47 = vld [vmem:[#allocation5] sm:$0xff]
    %v48 = vld [vmem:[#allocation5 + $0x8] sm:$0xff]
    %v49 = vld [vmem:[#allocation5 + $0x10] sm:$0xff]
    %v50 = vld [vmem:[#allocation5 + $0x18] sm:$0xff]
    %v51 = vld [vmem:[#allocation5 + $0x20] sm:$0xff]
    %v52 = vld [vmem:[#allocation5 + $0x28] sm:$0xff]
    %v53 = vld [vmem:[#allocation5 + $0x30] sm:$0xff]
    %v54 = vld [vmem:[#allocation5 + $0x38] sm:$0xff]
    %v55 = vld [vmem:[#allocation5 + $0x40] sm:$0xff]
    %v56 = vld [vmem:[#allocation5 + $0x48] sm:$0xff]
    %v57 = vld [vmem:[#allocation5 + $0x50] sm:$0xff]
    %v58 = vld [vmem:[#allocation5 + $0x58] sm:$0xff]
    %v59 = vld [vmem:[#allocation5 + $0x60] sm:$0xff]
    %v60 = vld [vmem:[#allocation5 + $0x68] sm:$0xff]
    %v61 = vld [vmem:[#allocation5 + $0x70] sm:$0xff]
    %v62 = vld [vmem:[#allocation5 + $0x78] sm:$0xff]
    %v63 = vld [vmem:[%s2] sm:$0x1]
    %v64 = vlaneseq
    %v65 = vshrl.u32 %v64, 7
    %v66 = vsub.s32 0, %v65
    %v67 = vrot.slane %v63, %v66
    %68 = vmatprep.subr.mxu0 0.0
    %69 = vmatpush1.msra.mxu0 %v47
    %70 = vmatprep.subr.mxu0 0.0
    %71 = vmatpush1.msra.mxu0 %v48
    %72 = vmatprep.subr.mxu0 0.0
    %73 = vmatpush1.msra.mxu0 %v49
    %74 = vmatprep.subr.mxu0 0.0
    %75 = vmatpush1.msra.mxu0 %v50
    %76 = vmatprep.subr.mxu0 0.0
    %77 = vmatpush1.msra.mxu0 %v51
    %78 = vmatprep.subr.mxu0 0.0
    %79 = vmatpush1.msra.mxu0 %v52
    %80 = vmatprep.subr.mxu0 0.0
    %81 = vmatpush1.msra.mxu0 %v53
    %82 = vmatprep.subr.mxu0 0.0
    %83 = vmatpush1.msra.mxu0 %v54
    %84 = vmatprep.subr.mxu0 0.0
    %85 = vmatpush1.msra.mxu0 %v55
    %86 = vmatprep.subr.mxu0 0.0
    %87 = vmatpush1.msra.mxu0 %v56
    %88 = vmatprep.subr.mxu0 0.0
    %89 = vmatpush1.msra.mxu0 %v57
    %90 = vmatprep.subr.mxu0 0.0
    %91 = vmatpush1.msra.mxu0 %v58
    %92 = vmatprep.subr.mxu0 0.0
    %93 = vmatpush1.msra.mxu0 %v59
    %94 = vmatprep.subr.mxu0 0.0
    %95 = vmatpush1.msra.mxu0 %v60
    %96 = vmatprep.subr.mxu0 0.0
    %97 = vmatpush1.msra.mxu0 %v61
    %98 = vmatprep.subr.mxu0 0.0
    %99 = vmatpush1.msra.mxu0 %v62
    %100 = vmatprep.subr.mxu0 0.0
    %101 = vmatpush1.msra.mxu0 0.0
    %102 = vmatprep.subr.mxu0 0.0
    %103 = vmatpush1.msra.mxu0 0.0
    %104 = vmatprep.subr.mxu0 0.0
    %105 = vmatpush1.msra.mxu0 0.0
    %106 = vmatprep.subr.mxu0 0.0
    %107 = vmatpush1.msra.mxu0 0.0
    %108 = vmatprep.subr.mxu0 0.0
    %109 = vmatpush1.msra.mxu0 0.0
    %110 = vmatprep.subr.mxu0 0.0
    %111 = vmatpush1.msra.mxu0 0.0
    %112 = vmatprep.subr.mxu0 0.0
    %113 = vmatpush1.msra.mxu0 0.0
    %114 = vmatprep.subr.mxu0 0.0
    %115 = vmatpush1.msra.mxu0 0.0
    %116 = vmatprep.subr.mxu0 0.0
    %117 = vmatpush1.msra.mxu0 0.0
    %118 = vmatprep.subr.mxu0 0.0
    %119 = vmatpush1.msra.mxu0 0.0
    %120 = vmatprep.subr.mxu0 0.0
    %121 = vmatpush1.msra.mxu0 0.0
    %122 = vmatprep.subr.mxu0 0.0
    %123 = vmatpush1.msra.mxu0 0.0
    %124 = vmatprep.subr.mxu0 0.0
    %125 = vmatpush1.msra.mxu0 0.0
    %126 = vmatprep.subr.mxu0 0.0
    %127 = vmatpush1.msra.mxu0 0.0
    %128 = vmatprep.subr.mxu0 0.0
    %129 = vmatpush1.msra.mxu0 0.0
    %130 = vmatprep.subr.mxu0 0.0
    %131 = vmatpush1.msra.mxu0 0.0
    %132 = vmatprep.mubr.f32.mxu0 0.0
    %133 = vmatmul.mubr.f32.gmra.mrb[0].mxu0 %v43
    %v134 = vpop.f32.mrb[0].mxu0
    %v135 = vadd.f32 %v67, %v134
    %v136 = vpop.f32.mrb[0].mxu0
    %137 = vmatprep.mubr.f32.mxu0 0.0
    %138 = vmatmul.mubr.f32.gmra.mrb[0].mxu0 %v44
    %v139 = vpop.f32.mrb[0].mxu0
    %v140 = vadd.f32 %v67, %v139
    %v141 = vpop.f32.mrb[0].mxu0
    %142 = vmatprep.mubr.f32.mxu0 0.0
    %143 = vmatmul.mubr.f32.gmra.mrb[0].mxu0 %v45
    %v144 = vpop.f32.mrb[0].mxu0
    %v145 = vadd.f32 %v67, %v144
    %v146 = vpop.f32.mrb[0].mxu0
    %147 = vmatprep.mubr.f32.mxu0 0.0
    %148 = vmatmul.mubr.f32.gmra.mrb[0].mxu0 %v46
    %v149 = vpop.f32.mrb[0].mxu0
    %v150 = vadd.f32 %v67, %v149
    %v151 = vpop.f32.mrb[0].mxu0
    %152 = vdwg.mxu0
    %153 = vst [vmem:[#allocation7] sm:$0xff] %v135
    %154 = vst [vmem:[#allocation7 + $0x8] sm:$0xff] %v140
    %155 = vst [vmem:[#allocation7 + $0x10] sm:$0xff] %v145
    %156 = vst [vmem:[#allocation7 + $0x18] sm:$0xff] %v150
    // Predicated region
    $region22: #{tpu_custom_call.1} parent=1 // pred_check
      _
    $region23: #{tpu_custom_call.1} parent=1 // pred_check_branch
      %158 = sbr.rel (0) target = $region25
    $region24: #{tpu_custom_call.1} parent=1 // pred_region
      %s160 = ssub.s32 512, 512
      %161 = vsyncadd [#allocation4], %s160
      %s162 = sshll.u32 [#allocation7], 4
      %s163 = int_to_ptr.vmem [resolvable:$true] %s162
      %168 = dma.vmem_to_hbm [thread:$0]  %s163, 512, %s3, [#allocation4], 128, 128, 8
    $region25: #{tpu_custom_call.1} parent=1 // pred_fallthru
      _
    // Predicated region
    $region26: #{tpu_custom_call.1} parent=1 // pred_check
      _
    $region27: #{tpu_custom_call.1} parent=1 // pred_check_branch
      %170 = sbr.rel (0) target = $region29
    $region28: #{tpu_custom_call.1} parent=1 // pred_region
      %171 = dma.done [#allocation4], 512
    $region29: #{tpu_custom_call.1} parent=1 // pred_fallthru
      _
    %172 = vsyncpa [#allocation3], 1
    %173 = vsyncpa [#allocation6], 1
    %174 = vsyncpa [#allocation4], 1

</llo_original>
